<compile_context>
chip_gen: v6e
topology: v6e:2x2x1
jax: 0.10.0
libtpu: 0.0.40
codegen_flags: <defaults>
</compile_context>

<pallas_src>
import functools

import numpy as np
import jax
import jax.numpy as jnp
from jax import lax
from jax.experimental import pallas as pl
from jax.experimental.pallas import tpu as pltpu


def _round_up(x, m):
    return ((x + m - 1) // m) * m


def _cdiv(a, b):
    return -(-a // b)


def _supports_bf16_eup():
    """bf16 VPU/EUP exists on v6e / v7x; v5e and older would emulate (slower)."""
    try:
        kind = jax.devices()[0].device_kind.lower()
    except Exception:
        return False
    return any(t in kind for t in ("v6", "v7", "tpu7"))


# Contract the last dim of both operands: A[M,K] . B[N,K]^T -> [M,N] (NT form).
_NT_DIMS = (((1,), (1,)), ((), ()))


def critic_kernel(obs_ref, w1t_ref, b1t_ref, w2t_ref, b2t_ref, w3_ref, b3_ref,
                  out_ref, *, act_dtype):
    # obs tile is batch-major [TB, obs_dim]; everything downstream is computed
    # feature-major [features, TB] (batch on the 128-lane axis).
    x = obs_ref[...]                                                # [TB, obs_dim] f32

    # h1^T = W1^T @ x^T via NT dot_general -> no explicit transpose of the big tile.
    z1 = lax.dot_general(w1t_ref[...], x, _NT_DIMS,
                         preferred_element_type=jnp.float32) + b1t_ref[...]   # [h0, TB]
    h1 = jnp.tanh(z1.astype(act_dtype))                             # bf16 tanh on v6e/v7x

    z2 = jnp.dot(w2t_ref[...].astype(act_dtype), h1,
                 preferred_element_type=jnp.float32) + b2t_ref[...]           # [h1, TB]
    h2 = jnp.tanh(z2.astype(act_dtype))

    # Output layer (N=1): VPU multiply + sublane (XLU) reduce in f32; the result
    # [1, TB] is lane-dense along the batch.
    v = jnp.sum(h2.astype(jnp.float32) * w3_ref[...], axis=0, keepdims=True)  # [1, TB]
    out_ref[...] = v + b3_ref[...]


def critic_forward(obs, params, *, block_b=4096, bf16_tanh=None):
    """obs: [B, obs_dim] f32 -> value (torch-style squeeze: [B] for B>1, scalar for B==1)."""
    w1, b1, w2, b2, w3, b3 = params
    B, obs_dim = obs.shape
    h0 = w1.shape[1]
    h1d = w2.shape[1]

    if bf16_tanh is None:
        bf16_tanh = _supports_bf16_eup()
    act_dtype = jnp.bfloat16 if bf16_tanh else jnp.float32

    # Feature-major parameter views (tiny, one-time).
    w1t = w1.T                          # [h0, obs_dim]
    b1t = jnp.reshape(b1, (h0, 1))
    w2t = w2.T                          # [h1, h0]
    b2t = jnp.reshape(b2, (h1d, 1))
    w3c = jnp.reshape(w3, (h1d, 1))
    b3c = jnp.reshape(b3, (1, 1))

    # Batch tile lives on the lane axis.  No wrapper-side padding: the grid is
    # cdiv(B, TB) and Pallas masks the ragged last block.
    if B <= 128:
        TB = B                                           # single full-extent block
    else:
        TB = min(_round_up(block_b, 128), _round_up(B, 128))
        if _cdiv(B, TB) < 2:                             # >=2 steps so v7x megacore splits
            TB = _round_up(_cdiv(B, 2), 128)
    grid = (_cdiv(B, TB),)

    out = pl.pallas_call(
        functools.partial(critic_kernel, act_dtype=act_dtype),
        out_shape=jax.ShapeDtypeStruct((1, B), jnp.float32),
        grid=grid,
        in_specs=[
            pl.BlockSpec((TB, obs_dim), lambda i: (i, 0)),   # obs: tiled over batch
            pl.BlockSpec((h0, obs_dim), lambda i: (0, 0)),   # w1^T: resident
            pl.BlockSpec((h0, 1), lambda i: (0, 0)),         # b1:   resident
            pl.BlockSpec((h1d, h0), lambda i: (0, 0)),       # w2^T: resident
            pl.BlockSpec((h1d, 1), lambda i: (0, 0)),        # b2:   resident
            pl.BlockSpec((h1d, 1), lambda i: (0, 0)),        # w3:   resident
            pl.BlockSpec((1, 1), lambda i: (0, 0)),          # b3:   resident
        ],
        out_specs=pl.BlockSpec((1, TB), lambda i: (0, i)),   # lane-dense output
        compiler_params=pltpu.CompilerParams(
            dimension_semantics=("parallel",),               # megacore split on v7x
        ),
    )(obs, w1t, b1t, w2t, b2t, w3c, b3c)

    # torch .squeeze(): (B,) for B > 1, 0-d scalar for B == 1.
    return jnp.squeeze(out)


def init_params(key, obs_dim, hidden_sizes):
    """Orthogonal init (std=sqrt(2) hidden, 1.0 output), zero biases — mirrors
    layer_init() in the PyTorch module.  Weights stored [in, out]."""
    k1, k2, k3 = jax.random.split(key, 3)
    ortho = jax.nn.initializers.orthogonal
    h0, h1 = hidden_sizes
    w1 = ortho(scale=np.sqrt(2))(k1, (obs_dim, h0), jnp.float32)
    b1 = jnp.zeros((1, h0), jnp.float32)
    w2 = ortho(scale=np.sqrt(2))(k2, (h0, h1), jnp.float32)
    b2 = jnp.zeros((1, h1), jnp.float32)
    w3 = ortho(scale=1.0)(k3, (h1, 1), jnp.float32)
    b3 = jnp.zeros((1, 1), jnp.float32)
    return (w1, b1, w2, b2, w3, b3)


def _reference(obs, params):
    w1, b1, w2, b2, w3, b3 = params
    return jnp.squeeze(jnp.tanh(jnp.tanh(obs @ w1 + b1) @ w2 + b2) @ w3 + b3)


if __name__ == "__main__":
    key = jax.random.PRNGKey(0)
    k_obs1, k_obs2, k_params = jax.random.split(key, 3)

    obs_dim = 8
    hidden_sizes = (32, 32)
    params = init_params(k_params, obs_dim, hidden_sizes)

    bf16 = _supports_bf16_eup()
    tol = dict(rtol=5e-2, atol=5e-2) if bf16 else dict(rtol=1e-5, atol=1e-5)

    # Case 1: tiny batch -> single full-extent block (TB = B = 8).
    obs_small = jax.random.normal(k_obs1, (8, obs_dim), dtype=jnp.float32)
    v_small = critic_forward(obs_small, params)
    jax.block_until_ready(v_small)
    np.testing.assert_allclose(
        np.asarray(v_small), np.asarray(_reference(obs_small, params)), **tol)

    # Case 2: ragged multi-step grid: B=300 with TB forced to 128 -> grid=(3,),
    # last block has 44 valid lanes (exercises weight residency, the masked
    # ragged last block, and the lane-dense output path).
    obs_big = jax.random.normal(k_obs2, (300, obs_dim), dtype=jnp.float32)
    v_big = critic_forward(obs_big, params, block_b=128)
    jax.block_until_ready(v_big)
    np.testing.assert_allclose(
        np.asarray(v_big), np.asarray(_reference(obs_big, params)), **tol)

    print("KERNEL_OK")
</pallas_src>

<mosaic_0001>
module attributes {stable_mosaic.version = 11 : i64} {
  func.func @critic_kernel(%arg0: i32, %arg1: memref<8x8xf32, #tpu.memory_space<vmem>>, %arg2: memref<32x8xf32, #tpu.memory_space<vmem>>, %arg3: memref<32x1xf32, #tpu.memory_space<vmem>>, %arg4: memref<32x32xf32, #tpu.memory_space<vmem>>, %arg5: memref<32x1xf32, #tpu.memory_space<vmem>>, %arg6: memref<32x1xf32, #tpu.memory_space<vmem>>, %arg7: memref<1x1xf32, #tpu.memory_space<vmem>>, %arg8: memref<1x8xf32, #tpu.memory_space<vmem>>) attributes {dimension_semantics = [#tpu.dimension_semantics<parallel>], iteration_bounds = array<i64: 1>, scalar_prefetch = 0 : i64, scratch_operands = 0 : i64, tpu.core_type = #tpu.core_type<tc>, window_params = [{transform_indices = @transform_0, window_bounds = array<i64: 8, 8>}, {pipeline_mode = #tpu.pipeline_mode<synchronous>, transform_indices = @transform_1, window_bounds = array<i64: 32, 8>}, {pipeline_mode = #tpu.pipeline_mode<synchronous>, transform_indices = @transform_2, window_bounds = array<i64: 32, 1>}, {pipeline_mode = #tpu.pipeline_mode<synchronous>, transform_indices = @transform_3, window_bounds = array<i64: 32, 32>}, {pipeline_mode = #tpu.pipeline_mode<synchronous>, transform_indices = @transform_4, window_bounds = array<i64: 32, 1>}, {pipeline_mode = #tpu.pipeline_mode<synchronous>, transform_indices = @transform_5, window_bounds = array<i64: 32, 1>}, {pipeline_mode = #tpu.pipeline_mode<synchronous>, transform_indices = @transform_6, window_bounds = array<i64: 1, 1>}, {transform_indices = @transform_7, window_bounds = array<i64: 1, 8>}]} {
    %c0 = arith.constant 0 : index
    %c0_0 = arith.constant 0 : index
    %0 = vector.load %arg1[%c0, %c0_0] : memref<8x8xf32, #tpu.memory_space<vmem>>, vector<8x8xf32>
    %c0_1 = arith.constant 0 : index
    %c0_2 = arith.constant 0 : index
    %1 = vector.load %arg2[%c0_1, %c0_2] : memref<32x8xf32, #tpu.memory_space<vmem>>, vector<32x8xf32>
    %cst = arith.constant dense<0.000000e+00> : vector<32x8xf32>
    %2 = tpu.matmul %1, %0, %cst {dimension_numbers = #tpu.dot_dimension_numbers<[1], [1], [0], [0], [0, 0, 1, 0], [], []>} : vector<32x8xf32>, vector<8x8xf32>, vector<32x8xf32> -> vector<32x8xf32>
    %c0_3 = arith.constant 0 : index
    %c0_4 = arith.constant 0 : index
    %3 = vector.load %arg3[%c0_3, %c0_4] : memref<32x1xf32, #tpu.memory_space<vmem>>, vector<32x1xf32>
    %4 = vector.broadcast %3 : vector<32x1xf32> to vector<32x8xf32>
    %5 = arith.addf %2, %4 : vector<32x8xf32>
    %6 = math.tanh %5 : vector<32x8xf32>
    %c0_5 = arith.constant 0 : index
    %c0_6 = arith.constant 0 : index
    %7 = vector.load %arg4[%c0_5, %c0_6] : memref<32x32xf32, #tpu.memory_space<vmem>>, vector<32x32xf32>
    %cst_7 = arith.constant dense<0.000000e+00> : vector<32x8xf32>
    %8 = tpu.matmul %7, %6, %cst_7 {dimension_numbers = #tpu.dot_dimension_numbers<[1], [0], [0], [1], [0, 0, 1, 1], [], []>} : vector<32x32xf32>, vector<32x8xf32>, vector<32x8xf32> -> vector<32x8xf32>
    %c0_8 = arith.constant 0 : index
    %c0_9 = arith.constant 0 : index
    %9 = vector.load %arg5[%c0_8, %c0_9] : memref<32x1xf32, #tpu.memory_space<vmem>>, vector<32x1xf32>
    %10 = vector.broadcast %9 : vector<32x1xf32> to vector<32x8xf32>
    %11 = arith.addf %8, %10 : vector<32x8xf32>
    %12 = math.tanh %11 : vector<32x8xf32>
    %c0_10 = arith.constant 0 : index
    %c0_11 = arith.constant 0 : index
    %13 = vector.load %arg6[%c0_10, %c0_11] : memref<32x1xf32, #tpu.memory_space<vmem>>, vector<32x1xf32>
    %14 = vector.broadcast %13 : vector<32x1xf32> to vector<32x8xf32>
    %15 = arith.mulf %12, %14 : vector<32x8xf32>
    %cst_12 = arith.constant dense<0.000000e+00> : vector<8xf32>
    %16 = vector.multi_reduction <add>, %15, %cst_12 [0] : vector<32x8xf32> to vector<8xf32>
    %17 = vector.shape_cast %16 : vector<8xf32> to vector<1x8xf32>
    %c0_13 = arith.constant 0 : index
    %c0_14 = arith.constant 0 : index
    %18 = vector.load %arg7[%c0_13, %c0_14] : memref<1x1xf32, #tpu.memory_space<vmem>>, vector<1x1xf32>
    %19 = vector.broadcast %18 : vector<1x1xf32> to vector<1x8xf32>
    %20 = arith.addf %17, %19 : vector<1x8xf32>
    %c0_15 = arith.constant 0 : index
    %c0_16 = arith.constant 0 : index
    %21 = vector.load %arg8[%c0_15, %c0_16] : memref<1x8xf32, #tpu.memory_space<vmem>>, vector<1x8xf32>
    tpu.vector_store %arg8[%c0_15, %c0_16], %20 {strides = array<i32>} : memref<1x8xf32, #tpu.memory_space<vmem>>, vector<1x8xf32>,
    return
  }
  func.func @transform_0(%arg0: i32) -> (i32, i32) {
    %c0_i32 = arith.constant 0 : i32
    %c0_i32_0 = arith.constant 0 : i32
    return %arg0, %c0_i32 : i32, i32
  }
  func.func @transform_1(%arg0: i32) -> (i32, i32) {
    %c0_i32 = arith.constant 0 : i32
    %c0_i32_0 = arith.constant 0 : i32
    %c0_i32_1 = arith.constant 0 : i32
    return %c0_i32, %c0_i32_0 : i32, i32
  }
  func.func @transform_2(%arg0: i32) -> (i32, i32) {
    %c0_i32 = arith.constant 0 : i32
    %c0_i32_0 = arith.constant 0 : i32
    %c0_i32_1 = arith.constant 0 : i32
    return %c0_i32, %c0_i32_0 : i32, i32
  }
  func.func @transform_3(%arg0: i32) -> (i32, i32) {
    %c0_i32 = arith.constant 0 : i32
    %c0_i32_0 = arith.constant 0 : i32
    %c0_i32_1 = arith.constant 0 : i32
    return %c0_i32, %c0_i32_0 : i32, i32
  }
  func.func @transform_4(%arg0: i32) -> (i32, i32) {
    %c0_i32 = arith.constant 0 : i32
    %c0_i32_0 = arith.constant 0 : i32
    %c0_i32_1 = arith.constant 0 : i32
    return %c0_i32, %c0_i32_0 : i32, i32
  }
  func.func @transform_5(%arg0: i32) -> (i32, i32) {
    %c0_i32 = arith.constant 0 : i32
    %c0_i32_0 = arith.constant 0 : i32
    %c0_i32_1 = arith.constant 0 : i32
    return %c0_i32, %c0_i32_0 : i32, i32
  }
  func.func @transform_6(%arg0: i32) -> (i32, i32) {
    %c0_i32 = arith.constant 0 : i32
    %c0_i32_0 = arith.constant 0 : i32
    %c0_i32_1 = arith.constant 0 : i32
    return %c0_i32, %c0_i32_0 : i32, i32
  }
  func.func @transform_7(%arg0: i32) -> (i32, i32) {
    %c0_i32 = arith.constant 0 : i32
    %c0_i32_0 = arith.constant 0 : i32
    return %c0_i32, %arg0 : i32, i32
  }
}

</mosaic_0001>

<llo_original>
// kernel: tpu_custom_call.1
$region0: #{tpu_custom_call.1}
  #allocation0 [shape = 'u32[]', space=smem, size = 0x4, offset = 0x4, fixed_abs, tag = 'smem constant byte address 0x4 - core index']
  #allocation1 [shape = 'u32[144,128]{1,0:T(1,128)}', space=vmem, size = 0x12000, scoped, tag = 'internal scratch']
  #allocation2 [shape = 'f32[1,1]{1,0:T(1,128)S(1)}', space=vmem, size = 0x200, scoped, tag = 'scoped memory for tpu_custom_call.1']
  %s0 = inlined_call_operand.vmem [shape: f32[8,8], index: 0, kind: input, shape index: {}]
  %s1 = inlined_call_operand.vmem [shape: f32[32,8], index: 1, kind: input, shape index: {}]
  %s2 = inlined_call_operand.vmem [shape: f32[32,1], index: 2, kind: input, shape index: {}]
  %s3 = inlined_call_operand.vmem [shape: f32[32,32], index: 3, kind: input, shape index: {}]
  %s4 = inlined_call_operand.vmem [shape: f32[32,1], index: 4, kind: input, shape index: {}]
  %s5 = inlined_call_operand.vmem [shape: f32[32,1], index: 5, kind: input, shape index: {}]
  %s6 = inlined_call_operand.<no memory space> [shape: f32[1,1], index: 6, kind: input, shape index: {}]
  %s7 = inlined_call_operand.hbm [shape: f32[1,8], index: 7, kind: output, shape index: {}]
  %s8 = sld [smem:[#allocation0]]
  $region38: #{tpu_custom_call.1} parent=0
    _
  %s10 = ssub.s32 1, %s8
  %s11 = scalar_select 0, %s10, %s8
  %v12 = vstv %s6
  %13 = vst [vmem:[#allocation2] sm:$0x1] %v12
  $region1: #{tpu_custom_call.1} parent=0
    #allocation3 [shape = 'u8[512]{0}', space=vmem, size = 0x400, scoped, tag = 'output window, operand 0, single buffered']
    #allocation4 [shape = 's32[1]{0}', space=sflag, size = 0x4, scoped, tag = 'scoped memory for tpu_custom_call.1']
    %14 = vsyncpa [#allocation4], 0
    // Predicated region
    $region2: #{tpu_custom_call.1} parent=1 // pred_check
      _
    $region3: #{tpu_custom_call.1} parent=1 // pred_check_branch
      %16 = sbr.rel (0) target = $region5
    $region4: #{tpu_custom_call.1} parent=1 // pred_region
      _
    $region5: #{tpu_custom_call.1} parent=1 // pred_fallthru
      _
    // Predicated region
    $region6: #{tpu_custom_call.1} parent=1 // pred_check
      _
    $region7: #{tpu_custom_call.1} parent=1 // pred_check_branch
      %18 = sbr.rel (0) target = $region9
    $region8: #{tpu_custom_call.1} parent=1 // pred_region
      _
    $region9: #{tpu_custom_call.1} parent=1 // pred_fallthru
      _
    // Predicated region
    $region10: #{tpu_custom_call.1} parent=1 // pred_check
      _
    $region11: #{tpu_custom_call.1} parent=1 // pred_check_branch
      %20 = sbr.rel (0) target = $region13
    $region12: #{tpu_custom_call.1} parent=1 // pred_region
      _
    $region13: #{tpu_custom_call.1} parent=1 // pred_fallthru
      _
    // Predicated region
    $region14: #{tpu_custom_call.1} parent=1 // pred_check
      _
    $region15: #{tpu_custom_call.1} parent=1 // pred_check_branch
      %22 = sbr.rel (0) target = $region17
    $region16: #{tpu_custom_call.1} parent=1 // pred_region
      _
    $region17: #{tpu_custom_call.1} parent=1 // pred_fallthru
      _
    // Predicated region
    $region18: #{tpu_custom_call.1} parent=1 // pred_check
      _
    $region19: #{tpu_custom_call.1} parent=1 // pred_check_branch
      %24 = sbr.rel (0) target = $region21
    $region20: #{tpu_custom_call.1} parent=1 // pred_region
      _
    $region21: #{tpu_custom_call.1} parent=1 // pred_fallthru
      _
    // Predicated region
    $region22: #{tpu_custom_call.1} parent=1 // pred_check
      _
    $region23: #{tpu_custom_call.1} parent=1 // pred_check_branch
      %26 = sbr.rel (0) target = $region25
    $region24: #{tpu_custom_call.1} parent=1 // pred_region
      _
    $region25: #{tpu_custom_call.1} parent=1 // pred_fallthru
      _
    // Predicated region
    $region26: #{tpu_custom_call.1} parent=1 // pred_check
      _
    $region27: #{tpu_custom_call.1} parent=1 // pred_check_branch
      %28 = sbr.rel (0) target = $region29
    $region28: #{tpu_custom_call.1} parent=1 // pred_region
      _
    $region29: #{tpu_custom_call.1} parent=1 // pred_fallthru
      _
    %v29 = vld [vmem:[%s0] sm:$0xff]
    %v30 = vld [vmem:[%s1] sm:$0xff]
    %v31 = vld [vmem:[%s1 + $0x8] sm:$0xff]
    %v32 = vld [vmem:[%s1 + $0x10] sm:$0xff]
    %v33 = vld [vmem:[%s1 + $0x18] sm:$0xff]
    %v34 = vld [vmem:[%s2] sm:$0xff]
    %v35 = vld [vmem:[%s2 + $0x8] sm:$0xff]
    %v36 = vld [vmem:[%s2 + $0x10] sm:$0xff]
    %v37 = vld [vmem:[%s2 + $0x18] sm:$0xff]
    %39 = vset.pattern.permute.xlu0 0
    %40 = vperm.xlu0 %39, %v34
    %v41 = vpop.permute.xlu0 %40
    %44 = vset.pattern.permute.xlu0 0
    %45 = vperm.xlu0 %44, %v35
    %v46 = vpop.permute.xlu0 %45
    %49 = vset.pattern.permute.xlu0 0
    %50 = vperm.xlu0 %49, %v36
    %v51 = vpop.permute.xlu0 %50
    %54 = vset.pattern.permute.xlu0 0
    %55 = vperm.xlu0 %54, %v37
    %v56 = vpop.permute.xlu0 %55
    %vm58 = vcmask 64512
    %v60 = vsel %vm58, %v30, 0
    %v63 = vsel %vm58, %v31, 0
    %v66 = vsel %vm58, %v32, 0
    %v69 = vsel %vm58, %v33, 0
    %v72 = vsel %vm58, %v29, 0
    %74 = vmatprep.subr.mxu0 0.0
    %75 = vmatpush1.xpose.msra.mxu0 0.0
    %76 = vmatprep.subr.mxu0 0.0
    %77 = vmatpush1.xpose.msra.mxu0 0.0
    %78 = vmatprep.subr.mxu0 0.0
    %79 = vmatpush1.xpose.msra.mxu0 0.0
    %80 = vmatprep.subr.mxu0 0.0
    %81 = vmatpush1.xpose.msra.mxu0 0.0
    %82 = vmatprep.subr.mxu0 0.0
    %83 = vmatpush1.xpose.msra.mxu0 0.0
    %84 = vmatprep.subr.mxu0 0.0
    %85 = vmatpush1.xpose.msra.mxu0 0.0
    %86 = vmatprep.subr.mxu0 0.0
    %87 = vmatpush1.xpose.msra.mxu0 0.0
    %88 = vmatprep.subr.mxu0 0.0
    %89 = vmatpush1.xpose.msra.mxu0 0.0
    %90 = vmatprep.subr.mxu0 0.0
    %91 = vmatpush1.xpose.msra.mxu0 0.0
    %92 = vmatprep.subr.mxu0 0.0
    %93 = vmatpush1.xpose.msra.mxu0 0.0
    %94 = vmatprep.subr.mxu0 0.0
    %95 = vmatpush1.xpose.msra.mxu0 0.0
    %96 = vmatprep.subr.mxu0 0.0
    %97 = vmatpush1.xpose.msra.mxu0 0.0
    %98 = vmatprep.subr.mxu0 0.0
    %99 = vmatpush1.xpose.msra.mxu0 0.0
    %100 = vmatprep.subr.mxu0 0.0
    %101 = vmatpush1.xpose.msra.mxu0 0.0
    %102 = vmatprep.subr.mxu0 0.0
    %103 = vmatpush1.xpose.msra.mxu0 0.0
    %104 = vmatprep.subr.mxu0 0.0
    %105 = vmatpush1.xpose.msra.mxu0 %v72
    %106 = vmatprep.subr.mxu0 0.0
    %107 = vmatpush2.xpose.msra.mxu0 0.0
    %108 = vmatprep.subr.mxu0 0.0
    %109 = vmatpush2.xpose.msra.mxu0 0.0
    %110 = vmatprep.subr.mxu0 0.0
    %111 = vmatpush2.xpose.msra.mxu0 0.0
    %112 = vmatprep.subr.mxu0 0.0
    %113 = vmatpush2.xpose.msra.mxu0 0.0
    %114 = vmatprep.subr.mxu0 0.0
    %115 = vmatpush2.xpose.msra.mxu0 0.0
    %116 = vmatprep.subr.mxu0 0.0
    %117 = vmatpush2.xpose.msra.mxu0 0.0
    %118 = vmatprep.subr.mxu0 0.0
    %119 = vmatpush2.xpose.msra.mxu0 0.0
    %120 = vmatprep.subr.mxu0 0.0
    %121 = vmatpush2.xpose.msra.mxu0 0.0
    %122 = vmatprep.subr.mxu0 0.0
    %123 = vmatpush2.xpose.msra.mxu0 0.0
    %124 = vmatprep.subr.mxu0 0.0
    %125 = vmatpush2.xpose.msra.mxu0 0.0
    %126 = vmatprep.subr.mxu0 0.0
    %127 = vmatpush2.xpose.msra.mxu0 0.0
    %128 = vmatprep.subr.mxu0 0.0
    %129 = vmatpush2.xpose.msra.mxu0 0.0
    %130 = vmatprep.subr.mxu0 0.0
    %131 = vmatpush2.xpose.msra.mxu0 0.0
    %132 = vmatprep.subr.mxu0 0.0
    %133 = vmatpush2.xpose.msra.mxu0 0.0
    %134 = vmatprep.subr.mxu0 0.0
    %135 = vmatpush2.xpose.msra.mxu0 0.0
    %136 = vmatprep.subr.mxu0 0.0
    %137 = vmatpush2.xpose.msra.mxu0 0.0
    %138 = vmatprep.mubr.f32.mxu0 0.0
    %139 = vmatmul.mubr.f32.gmra.mxu0 %v60
    %v140 = vpop.f32.mrf.mxu0
    %v141 = vadd.f32 %v41, %v140
    %v142 = vpop.f32.mrf.mxu0
    %143 = vmatprep.mubr.f32.mxu0 0.0
    %144 = vmatmul.mubr.f32.gmra.mxu0 %v63
    %v145 = vpop.f32.mrf.mxu0
    %v146 = vadd.f32 %v46, %v145
    %v147 = vpop.f32.mrf.mxu0
    %148 = vmatprep.mubr.f32.mxu0 0.0
    %149 = vmatmul.mubr.f32.gmra.mxu0 %v66
    %v150 = vpop.f32.mrf.mxu0
    %v151 = vadd.f32 %v51, %v150
    %v152 = vpop.f32.mrf.mxu0
    %153 = vmatprep.mubr.f32.mxu0 0.0
    %154 = vmatmul.mubr.f32.gmra.mxu0 %v69
    %v155 = vpop.f32.mrf.mxu0
    %v156 = vadd.f32 %v56, %v155
    %v157 = vpop.f32.mrf.mxu0
    %158 = vdwg.mxu0
    %v159 = vtanh.pop %v141
    %v160 = vtanh.pop %v146
    %v161 = vtanh.pop %v151
    %v162 = vtanh.pop %v156
    %v163 = vld [vmem:[%s3] sm:$0xff]
    %v164 = vld [vmem:[%s3 + $0x8] sm:$0xff]
    %v165 = vld [vmem:[%s3 + $0x10] sm:$0xff]
    %v166 = vld [vmem:[%s3 + $0x18] sm:$0xff]
    %v167 = vld [vmem:[%s4] sm:$0xff]
    %v168 = vld [vmem:[%s4 + $0x8] sm:$0xff]
    %v169 = vld [vmem:[%s4 + $0x10] sm:$0xff]
    %v170 = vld [vmem:[%s4 + $0x18] sm:$0xff]
    %172 = vset.pattern.permute.xlu0 0
    %173 = vperm.xlu0 %172, %v167
    %v174 = vpop.permute.xlu0 %173
    %177 = vset.pattern.permute.xlu0 0
    %178 = vperm.xlu0 %177, %v168
    %v179 = vpop.permute.xlu0 %178
    %182 = vset.pattern.permute.xlu0 0
    %183 = vperm.xlu0 %182, %v169
    %v184 = vpop.permute.xlu0 %183
    %187 = vset.pattern.permute.xlu0 0
    %188 = vperm.xlu0 %187, %v170
    %v189 = vpop.permute.xlu0 %188
    %vm191 = vcmask 261120
    %v193 = vsel %vm191, %v163, 0
    %v196 = vsel %vm191, %v164, 0
    %v199 = vsel %vm191, %v165, 0
    %v202 = vsel %vm191, %v166, 0
    %204 = vmatprep.subr.mxu0 0.0
    %205 = vmatpush1.msra.mxu0 0.0
    %206 = vmatprep.subr.mxu0 0.0
    %207 = vmatpush1.msra.mxu0 0.0
    %208 = vmatprep.subr.mxu0 0.0
    %209 = vmatpush1.msra.mxu0 0.0
    %210 = vmatprep.subr.mxu0 0.0
    %211 = vmatpush1.msra.mxu0 0.0
    %212 = vmatprep.subr.mxu0 0.0
    %213 = vmatpush1.msra.mxu0 0.0
    %214 = vmatprep.subr.mxu0 0.0
    %215 = vmatpush1.msra.mxu0 0.0
    %216 = vmatprep.subr.mxu0 0.0
    %217 = vmatpush1.msra.mxu0 0.0
    %218 = vmatprep.subr.mxu0 0.0
    %219 = vmatpush1.msra.mxu0 0.0
    %220 = vmatprep.subr.mxu0 0.0
    %221 = vmatpush1.msra.mxu0 0.0
    %222 = vmatprep.subr.mxu0 0.0
    %223 = vmatpush1.msra.mxu0 0.0
    %224 = vmatprep.subr.mxu0 0.0
    %225 = vmatpush1.msra.mxu0 0.0
    %226 = vmatprep.subr.mxu0 0.0
    %227 = vmatpush1.msra.mxu0 0.0
    %228 = vmatprep.subr.mxu0 0.0
    %229 = vmatpush1.msra.mxu0 %v162
    %230 = vmatprep.subr.mxu0 0.0
    %231 = vmatpush1.msra.mxu0 %v161
    %232 = vmatprep.subr.mxu0 0.0
    %233 = vmatpush1.msra.mxu0 %v160
    %234 = vmatprep.subr.mxu0 0.0
    %235 = vmatpush1.msra.mxu0 %v159
    %236 = vmatprep.subr.mxu0 0.0
    %237 = vmatpush2.msra.mxu0 0.0
    %238 = vmatprep.subr.mxu0 0.0
    %239 = vmatpush2.msra.mxu0 0.0
    %240 = vmatprep.subr.mxu0 0.0
    %241 = vmatpush2.msra.mxu0 0.0
    %242 = vmatprep.subr.mxu0 0.0
    %243 = vmatpush2.msra.mxu0 0.0
    %244 = vmatprep.subr.mxu0 0.0
    %245 = vmatpush2.msra.mxu0 0.0
    %246 = vmatprep.subr.mxu0 0.0
    %247 = vmatpush2.msra.mxu0 0.0
    %248 = vmatprep.subr.mxu0 0.0
    %249 = vmatpush2.msra.mxu0 0.0
    %250 = vmatprep.subr.mxu0 0.0
    %251 = vmatpush2.msra.mxu0 0.0
    %252 = vmatprep.subr.mxu0 0.0
    %253 = vmatpush2.msra.mxu0 0.0
    %254 = vmatprep.subr.mxu0 0.0
    %255 = vmatpush2.msra.mxu0 0.0
    %256 = vmatprep.subr.mxu0 0.0
    %257 = vmatpush2.msra.mxu0 0.0
    %258 = vmatprep.subr.mxu0 0.0
    %259 = vmatpush2.msra.mxu0 0.0
    %260 = vmatprep.subr.mxu0 0.0
    %261 = vmatpush2.msra.mxu0 0.0
    %262 = vmatprep.subr.mxu0 0.0
    %263 = vmatpush2.msra.mxu0 0.0
    %264 = vmatprep.subr.mxu0 0.0
    %265 = vmatpush2.msra.mxu0 0.0
    %266 = vmatprep.subr.mxu0 0.0
    %267 = vmatpush2.msra.mxu0 0.0
    %268 = vmatprep.mubr.f32.mxu0 0.0
    %269 = vmatmul.mubr.f32.gmra.mxu0 %v193
    %v270 = vpop.f32.mrf.mxu0
    %v271 = vadd.f32 %v174, %v270
    %v272 = vpop.f32.mrf.mxu0
    %273 = vmatprep.mubr.f32.mxu0 0.0
    %274 = vmatmul.mubr.f32.gmra.mxu0 %v196
    %v275 = vpop.f32.mrf.mxu0
    %v276 = vadd.f32 %v179, %v275
    %v277 = vpop.f32.mrf.mxu0
    %278 = vmatprep.mubr.f32.mxu0 0.0
    %279 = vmatmul.mubr.f32.gmra.mxu0 %v199
    %v280 = vpop.f32.mrf.mxu0
    %v281 = vadd.f32 %v184, %v280
    %v282 = vpop.f32.mrf.mxu0
    %283 = vmatprep.mubr.f32.mxu0 0.0
    %284 = vmatmul.mubr.f32.gmra.mxu0 %v202
    %v285 = vpop.f32.mrf.mxu0
    %v286 = vadd.f32 %v189, %v285
    %v287 = vpop.f32.mrf.mxu0
    %288 = vdwg.mxu0
    %v289 = vtanh.pop %v271
    %v290 = vtanh.pop %v276
    %v291 = vtanh.pop %v281
    %v292 = vtanh.pop %v286
    %v293 = vld [vmem:[%s5] sm:$0xff]
    %v294 = vld [vmem:[%s5 + $0x8] sm:$0xff]
    %v295 = vld [vmem:[%s5 + $0x10] sm:$0xff]
    %v296 = vld [vmem:[%s5 + $0x18] sm:$0xff]
    %298 = vset.pattern.permute.xlu0 0
    %299 = vperm.xlu0 %298, %v293
    %v300 = vpop.permute.xlu0 %299
    %303 = vset.pattern.permute.xlu0 0
    %304 = vperm.xlu0 %303, %v294
    %v305 = vpop.permute.xlu0 %304
    %308 = vset.pattern.permute.xlu0 0
    %309 = vperm.xlu0 %308, %v295
    %v310 = vpop.permute.xlu0 %309
    %313 = vset.pattern.permute.xlu0 0
    %314 = vperm.xlu0 %313, %v296
    %v315 = vpop.permute.xlu0 %314
    %v317 = vmul.f32 %v289, %v300
    %v318 = vmul.f32 %v290, %v305
    %v319 = vmul.f32 %v291, %v310
    %v320 = vmul.f32 %v292, %v315
    %v321 = vsel %vm58, %v317, 0.0
    %v322 = vsel %vm58, %v318, 0.0
    %v323 = vadd.f32 %v321, %v322
    %v324 = vsel %vm58, %v319, 0.0
    %v325 = vadd.f32 %v323, %v324
    %v326 = vsel %vm58, %v320, 0.0
    %v327 = vadd.f32 %v325, %v326
    %v328 = vrot.slane %v327, 4
    %v329 = vadd.f32 %v327, %v328
    %v330 = vrot.slane %v329, 2
    %v331 = vadd.f32 %v329, %v330
    %v332 = vrot.slane %v331, 1
    %v333 = vadd.f32 %v331, %v332
    %v334 = vld [vmem:[#allocation2] sm:$0x1]
    %336 = vset.pattern.permute.xlu0 0
    %337 = vperm.xlu0 %336, %v334
    %v338 = vpop.permute.xlu0 %337
    %v340 = vlaneseq
    %v341 = vshrl.u32 %v340, 7
    %v342 = vsub.s32 0, %v341
    %v343 = vrot.slane %v338, %v342
    %v344 = vadd.f32 %v333, %v343
    %vm345 = vcmask 57344
    %346 = vst.msk [vmem:[#allocation3] sm:$0x1] %vm345, %v344
    // Predicated region
    $region30: #{tpu_custom_call.1} parent=1 // pred_check
      _
    $region31: #{tpu_custom_call.1} parent=1 // pred_check_branch
      %348 = sbr.rel (0) target = $region33
    $region32: #{tpu_custom_call.1} parent=1 // pred_region
      %s350 = ssub.s32 16, 16
      %351 = vsyncadd [#allocation4], %s350
      %s353 = sshll.u32 [#allocation3], 4
      %s354 = int_to_ptr.vmem [resolvable:$true] %s353
      %356 = dma.vmem_to_hbm [thread:$0]  %s354, 16, %s7, [#allocation4]
    $region33: #{tpu_custom_call.1} parent=1 // pred_fallthru
      _
    // Predicated region
    $region34: #{tpu_custom_call.1} parent=1 // pred_check
      _
    $region35: #{tpu_custom_call.1} parent=1 // pred_check_branch
      %358 = sbr.rel (0) target = $region37
    $region36: #{tpu_custom_call.1} parent=1 // pred_region
      %359 = dma.done [#allocation4], 16
    $region37: #{tpu_custom_call.1} parent=1 // pred_fallthru
      _
    %360 = vsyncpa [#allocation4], 1

</llo_original>
